<compile_context>
chip_gen: v7x
topology: tpu7x:2x2x1
jax: 0.10.0
libtpu: 0.0.40
codegen_flags: <defaults>
</compile_context>

<pallas_src>
import functools

import jax
import jax.numpy as jnp
from jax.experimental import pallas as pl
from jax.experimental.pallas import tpu as pltpu


def _group_norm_kernel(x_ref, w_ref, b_ref, o_ref, *, eps, n_valid):
    """One (batch, group) tile.

    x_ref/o_ref : (rows, cols) lane-dense tile (cols % 128 == 0). Pad columns,
                  if any, are zero and excluded from statistics via n_valid.
    w_ref/b_ref : (rows, 1) per-row (= per-channel) affine params for this
                  group, fetched per grid step (only rows*4 real bytes of DMA).
    """
    # Single fused sweep: sum and sum-of-squares, accumulated in f32.
    # var = (ss - s^2/N) / (N-1): torch.var's unbiased default, as the module.
    x = x_ref[...].astype(jnp.float32)
    s = jnp.sum(x)
    ss = jnp.sum(x * x)

    mean = s / n_valid
    denom = max(n_valid - 1, 1)           # guard degenerate single-element group
    var = jnp.maximum((ss - s * mean) / denom, 0.0)
    inv_std = jax.lax.rsqrt(var + eps)

    # Fold normalization + affine into per-row scale/shift:
    #   (x - mean) * inv_std * w + b == x * (w*inv_std) + (b - mean*w*inv_std)
    w = w_ref[...].astype(jnp.float32)    # (rows, 1)
    b = b_ref[...].astype(jnp.float32)    # (rows, 1)
    scale = w * inv_std
    shift = b - mean * scale

    # Re-read x for the epilogue so the f32 working copy is not kept live
    # across the reductions; bf16 inputs keep the MAD in bf16 (VALU bf16 on
    # v6e/v7x), halving epilogue vector-load bytes.
    xe = x_ref[...]
    if xe.dtype == jnp.bfloat16:
        o_ref[...] = (xe * scale.astype(jnp.bfloat16)
                      + shift.astype(jnp.bfloat16)).astype(o_ref.dtype)
    else:
        o_ref[...] = (xe.astype(jnp.float32) * scale + shift).astype(o_ref.dtype)


def group_norm(x, weight, bias, num_groups, eps=1e-6):
    """x: (B, C, H, W); weight/bias: (1, C, 1, 1). Returns (B, C, H, W)."""
    B, C, H, W = x.shape
    G = num_groups
    if C % G != 0:
        raise ValueError("num_channels must be divisible by num_groups")
    n = C // G
    HW = H * W

    w_rows = weight.reshape(G, n, 1)
    b_rows = bias.reshape(G, n, 1)

    if HW % 128 == 0:
        # Lane-dense fast path: one group -> (n, HW) tile (free reshape of
        # NCHW). Each tile row is exactly one channel, so the per-channel
        # affine is a per-row affine directly -- no host-side jnp.repeat.
        cols = HW
        xs = x.reshape(B * G, n, cols)
        pad = 0
    else:
        # Fallback (covers h = w = 1, odd spatial sizes, ...): zero-pad each
        # channel's HW run up to a multiple of 128 so stores stay full-width
        # unmasked vst; the kernel divides by the true element count and zero
        # padding does not affect sum / sum-of-squares.
        cols = -(-HW // 128) * 128
        pad = cols - HW
        xs = jnp.pad(x.reshape(B, C, HW), ((0, 0), (0, 0), (0, pad)))
        xs = xs.reshape(B * G, n, cols)

    rows = n
    n_valid = n * HW

    # VMEM budget: double-buffered in/out tiles + transient f32 sweep +
    # lane-padded (rows, 1) params. Generation-aware cap: use v5e/v6e's
    # 128 MiB when available, leave ~8 MiB headroom on v7x's 64 MiB.
    itemsize = jnp.dtype(x.dtype).itemsize
    rows_pad = -(-rows // 8) * 8
    tile_bytes = rows_pad * cols * itemsize
    work_f32 = rows_pad * cols * 4
    param_bytes = 2 * 2 * rows_pad * 128 * 4
    needed = 4 * tile_bytes + 2 * work_f32 + param_bytes + (2 << 20)
    try:
        phys = int(getattr(pltpu.get_tpu_info(), "vmem_capacity_bytes", 64 << 20))
    except Exception:
        phys = 64 << 20
    cap = max(phys - (8 << 20), 32 << 20)
    vmem_limit = int(min(max(needed, 32 << 20), cap))
    # TODO(synk): when `needed > cap` (very large groups on v7x's 64 MiB VMEM),
    # split the reduction over an inner 'arbitrary' row-chunk axis (stats pass
    # + normalize pass) instead of relying on the compiler to shrink buffers.
    # TODO(synk): tiny groups (n*HW of a few 1e4) are per-step-overhead bound;
    # batching k (batch, group) tiles per grid step would help most on v5e.

    out = pl.pallas_call(
        functools.partial(_group_norm_kernel, eps=eps, n_valid=n_valid),
        out_shape=jax.ShapeDtypeStruct((B * G, rows, cols), x.dtype),
        grid=(B * G,),
        in_specs=[
            pl.BlockSpec((None, rows, cols), lambda i: (i, 0, 0)),
            # Fetch only this group's (rows, 1) params per step instead of
            # keeping (G, rows, 1) lane-padded params VMEM-resident.
            pl.BlockSpec((None, rows, 1), lambda i: (i % G, 0, 0)),
            pl.BlockSpec((None, rows, 1), lambda i: (i % G, 0, 0)),
        ],
        out_specs=pl.BlockSpec((None, rows, cols), lambda i: (i, 0, 0)),
        compiler_params=pltpu.CompilerParams(
            dimension_semantics=("parallel",),
            vmem_limit_bytes=vmem_limit,
        ),
    )(xs, w_rows, b_rows)

    out = out.reshape(B, C, cols)
    if pad:
        out = out[:, :, :HW]
    return out.reshape(B, C, H, W)


def _reference(x, weight, bias, num_groups, eps=1e-6):
    B, C, H, W = x.shape
    G = num_groups
    n = C // G
    xg = x.reshape(B, G, n * H * W).astype(jnp.float32)
    mean = jnp.mean(xg, axis=2, keepdims=True)
    var = jnp.var(xg, axis=2, keepdims=True, ddof=1)  # unbiased, as torch.var
    xn = (xg - mean) / jnp.sqrt(var + eps)
    xn = xn.reshape(B, C, H, W)
    return xn * weight + bias


if __name__ == "__main__":
    num_groups = 2
    num_channels = 4
    eps = 1e-6

    key = jax.random.PRNGKey(0)
    kx, kw, kb, kx2 = jax.random.split(key, 4)

    # Primary check: module-consistent shapes, default-initialized parameters.
    x = jax.random.normal(kx, (2, num_channels, 16, 16), dtype=jnp.float32)
    weight = jnp.ones((1, num_channels, 1, 1), dtype=jnp.float32)
    bias = jnp.zeros((1, num_channels, 1, 1), dtype=jnp.float32)

    out = group_norm(x, weight, bias, num_groups, eps)
    out = jax.block_until_ready(out)
    ref = _reference(x, weight, bias, num_groups, eps)
    assert out.shape == x.shape
    assert jnp.allclose(out, ref, atol=1e-4, rtol=1e-4)

    # Secondary check: non-128-multiple spatial size + non-trivial affine
    # (exercises the zero-padded fallback layout and the scale/shift fold).
    x2 = jax.random.normal(kx2, (2, num_channels, 5, 5), dtype=jnp.float32)
    w2 = jax.random.normal(kw, (1, num_channels, 1, 1), dtype=jnp.float32)
    b2 = jax.random.normal(kb, (1, num_channels, 1, 1), dtype=jnp.float32)
    out2 = jax.block_until_ready(group_norm(x2, w2, b2, num_groups, eps))
    ref2 = _reference(x2, w2, b2, num_groups, eps)
    assert jnp.allclose(out2, ref2, atol=1e-4, rtol=1e-4)

    print("KERNEL_OK")
</pallas_src>

<mosaic_0001>
module attributes {stable_mosaic.version = 11 : i64} {
  func.func @_group_norm_kernel(%arg0: i32, %arg1: memref<1x2x256xf32, #tpu.memory_space<vmem>>, %arg2: memref<1x2x1xf32, #tpu.memory_space<vmem>>, %arg3: memref<1x2x1xf32, #tpu.memory_space<vmem>>, %arg4: memref<1x2x256xf32, #tpu.memory_space<vmem>>) attributes {dimension_semantics = [#tpu.dimension_semantics<parallel>], iteration_bounds = array<i64: 4>, scalar_prefetch = 0 : i64, scratch_operands = 0 : i64, tpu.core_type = #tpu.core_type<tc>, window_params = [{transform_indices = @transform_0, window_bounds = array<i64: 1, 2, 256>}, {transform_indices = @transform_1, window_bounds = array<i64: 1, 2, 1>}, {transform_indices = @transform_2, window_bounds = array<i64: 1, 2, 1>}, {transform_indices = @transform_3, window_bounds = array<i64: 1, 2, 256>}]} {
    %c0 = arith.constant 0 : index
    %c0_0 = arith.constant 0 : index
    %c0_1 = arith.constant 0 : index
    %0 = vector.load %arg1[%c0, %c0_0, %c0_1] : memref<1x2x256xf32, #tpu.memory_space<vmem>>, vector<1x2x256xf32>
    %1 = vector.shape_cast %0 : vector<1x2x256xf32> to vector<2x256xf32>
    %2 = vector.shape_cast %1 : vector<2x256xf32> to vector<1x2x256xf32>
    %cst = arith.constant dense<0.000000e+00> : vector<1xf32>
    %3 = vector.multi_reduction <add>, %2, %cst [1, 2] : vector<1x2x256xf32> to vector<1xf32>
    %4 = vector.shape_cast %3 : vector<1xf32> to vector<1x1x1xf32>
    %5 = vector.extract %4[0, 0, 0] : f32 from vector<1x1x1xf32>
    %6 = arith.mulf %1, %1 : vector<2x256xf32>
    %7 = vector.shape_cast %6 : vector<2x256xf32> to vector<1x2x256xf32>
    %cst_2 = arith.constant dense<0.000000e+00> : vector<1xf32>
    %8 = vector.multi_reduction <add>, %7, %cst_2 [1, 2] : vector<1x2x256xf32> to vector<1xf32>
    %9 = vector.shape_cast %8 : vector<1xf32> to vector<1x1x1xf32>
    %10 = vector.extract %9[0, 0, 0] : f32 from vector<1x1x1xf32>
    %cst_3 = arith.constant 5.120000e+02 : f32
    %11 = arith.divf %5, %cst_3 : f32
    %12 = arith.mulf %5, %11 : f32
    %13 = arith.subf %10, %12 : f32
    %cst_4 = arith.constant 5.110000e+02 : f32
    %14 = arith.divf %13, %cst_4 : f32
    %cst_5 = arith.constant 0.000000e+00 : f32
    %15 = arith.maximumf %14, %cst_5 : f32
    %cst_6 = arith.constant 9.99999997E-7 : f32
    %16 = arith.addf %15, %cst_6 : f32
    %17 = math.rsqrt %16 : f32
    %c0_7 = arith.constant 0 : index
    %c0_8 = arith.constant 0 : index
    %c0_9 = arith.constant 0 : index
    %18 = vector.load %arg2[%c0_7, %c0_8, %c0_9] : memref<1x2x1xf32, #tpu.memory_space<vmem>>, vector<1x2x1xf32>
    %19 = vector.shape_cast %18 : vector<1x2x1xf32> to vector<2x1xf32>
    %c0_10 = arith.constant 0 : index
    %c0_11 = arith.constant 0 : index
    %c0_12 = arith.constant 0 : index
    %20 = vector.load %arg3[%c0_10, %c0_11, %c0_12] : memref<1x2x1xf32, #tpu.memory_space<vmem>>, vector<1x2x1xf32>
    %21 = vector.shape_cast %20 : vector<1x2x1xf32> to vector<2x1xf32>
    %22 = vector.broadcast %17 : f32 to vector<2x1xf32>
    %23 = arith.mulf %19, %22 : vector<2x1xf32>
    %24 = vector.broadcast %11 : f32 to vector<2x1xf32>
    %25 = arith.mulf %24, %23 : vector<2x1xf32>
    %26 = arith.subf %21, %25 : vector<2x1xf32>
    %c0_13 = arith.constant 0 : index
    %c0_14 = arith.constant 0 : index
    %c0_15 = arith.constant 0 : index
    %27 = vector.load %arg1[%c0_13, %c0_14, %c0_15] : memref<1x2x256xf32, #tpu.memory_space<vmem>>, vector<1x2x256xf32>
    %28 = vector.shape_cast %27 : vector<1x2x256xf32> to vector<2x256xf32>
    %29 = vector.broadcast %23 : vector<2x1xf32> to vector<2x256xf32>
    %30 = arith.mulf %28, %29 : vector<2x256xf32>
    %31 = vector.broadcast %26 : vector<2x1xf32> to vector<2x256xf32>
    %32 = arith.addf %30, %31 : vector<2x256xf32>
    %c0_16 = arith.constant 0 : index
    %c0_17 = arith.constant 0 : index
    %c0_18 = arith.constant 0 : index
    %33 = vector.load %arg4[%c0_16, %c0_17, %c0_18] : memref<1x2x256xf32, #tpu.memory_space<vmem>>, vector<1x2x256xf32>
    %34 = vector.shape_cast %33 : vector<1x2x256xf32> to vector<2x256xf32>
    %35 = vector.shape_cast %32 : vector<2x256xf32> to vector<1x2x256xf32>
    tpu.vector_store %arg4[%c0_16, %c0_17, %c0_18], %35 {strides = array<i32>} : memref<1x2x256xf32, #tpu.memory_space<vmem>>, vector<1x2x256xf32>,
    return
  }
  func.func @transform_0(%arg0: i32) -> (i32, i32, i32) {
    %c0_i32 = arith.constant 0 : i32
    %c0_i32_0 = arith.constant 0 : i32
    %c0_i32_1 = arith.constant 0 : i32
    return %arg0, %c0_i32, %c0_i32_0 : i32, i32, i32
  }
  func.func @transform_1(%arg0: i32) -> (i32, i32, i32) {
    %c2_i32 = arith.constant 2 : i32
    %c0_i32 = arith.constant 0 : i32
    %0 = arith.cmpi eq, %c2_i32, %c0_i32 : i32
    %c1_i32 = arith.constant 1 : i32
    %1 = arith.select %0, %c1_i32, %c2_i32 : i32
    %2 = arith.remsi %arg0, %1 : i32
    %c0_i32_0 = arith.constant 0 : i32
    %3 = arith.cmpi ne, %2, %c0_i32_0 : i32
    %c0_i32_1 = arith.constant 0 : i32
    %4 = arith.cmpi slt, %2, %c0_i32_1 : i32
    %c0_i32_2 = arith.constant 0 : i32
    %5 = arith.cmpi slt, %1, %c0_i32_2 : i32
    %6 = arith.xori %4, %5 : i1
    %7 = arith.andi %6, %3 : i1
    %8 = arith.addi %2, %1 : i32
    %9 = arith.select %7, %8, %2 : i32
    %c0_i32_3 = arith.constant 0 : i32
    %c0_i32_4 = arith.constant 0 : i32
    %c0_i32_5 = arith.constant 0 : i32
    return %9, %c0_i32_3, %c0_i32_4 : i32, i32, i32
  }
  func.func @transform_2(%arg0: i32) -> (i32, i32, i32) {
    %c2_i32 = arith.constant 2 : i32
    %c0_i32 = arith.constant 0 : i32
    %0 = arith.cmpi eq, %c2_i32, %c0_i32 : i32
    %c1_i32 = arith.constant 1 : i32
    %1 = arith.select %0, %c1_i32, %c2_i32 : i32
    %2 = arith.remsi %arg0, %1 : i32
    %c0_i32_0 = arith.constant 0 : i32
    %3 = arith.cmpi ne, %2, %c0_i32_0 : i32
    %c0_i32_1 = arith.constant 0 : i32
    %4 = arith.cmpi slt, %2, %c0_i32_1 : i32
    %c0_i32_2 = arith.constant 0 : i32
    %5 = arith.cmpi slt, %1, %c0_i32_2 : i32
    %6 = arith.xori %4, %5 : i1
    %7 = arith.andi %6, %3 : i1
    %8 = arith.addi %2, %1 : i32
    %9 = arith.select %7, %8, %2 : i32
    %c0_i32_3 = arith.constant 0 : i32
    %c0_i32_4 = arith.constant 0 : i32
    %c0_i32_5 = arith.constant 0 : i32
    return %9, %c0_i32_3, %c0_i32_4 : i32, i32, i32
  }
  func.func @transform_3(%arg0: i32) -> (i32, i32, i32) {
    %c0_i32 = arith.constant 0 : i32
    %c0_i32_0 = arith.constant 0 : i32
    %c0_i32_1 = arith.constant 0 : i32
    return %arg0, %c0_i32, %c0_i32_0 : i32, i32, i32
  }
}

</mosaic_0001>

<llo_original>
// kernel: tpu_custom_call.1
$region0: #{tpu_custom_call.1}
  #allocation0 [shape = 'u32[]', space=smem, size = 0x4, offset = 0x4, fixed_abs, tag = 'smem constant byte address 0x4 - core index']
  #allocation1 [shape = 'u32[144,128]{1,0:T(1,128)}', space=vmem, size = 0x12000, scoped, tag = 'internal scratch']
  %s0 = inlined_call_operand.hbm [shape: f32[4,2,256], index: 0, kind: input, shape index: {}]
  %s1 = inlined_call_operand.vmem [shape: f32[2,2,1], index: 1, kind: input, shape index: {}]
  %s2 = inlined_call_operand.vmem [shape: f32[2,2,1], index: 2, kind: input, shape index: {}]
  %s3 = inlined_call_operand.hbm [shape: f32[4,2,256], index: 3, kind: output, shape index: {}]
  %s4 = sld [smem:[#allocation0]]
  $region49: #{tpu_custom_call.1} parent=0
    _
  %s6 = ssub.s32 1, %s4
  %s7 = scalar_select 0, %s6, %s4
  $region1: #{tpu_custom_call.1} parent=0
    #allocation2 [shape = 'u8[4096]{0}', space=vmem, size = 0x1000, scoped, tag = 'input window, operand 0']
    #allocation3 [shape = 's32[2]{0}', space=sflag, size = 0x8, scoped, tag = 'scoped memory for tpu_custom_call.1']
    #allocation4 [shape = 's32[2]{0}', space=sflag, size = 0x8, scoped, tag = 'scoped memory for tpu_custom_call.1']
    #allocation5 [shape = 'u8[4096]{0}', space=vmem, size = 0x1000, scoped, tag = 'output window, operand 0']
    %8 = vsyncpa [#allocation3], 0
    %s9 = scalar_lea.sflag [#allocation3], 1
    %10 = vsyncpa %s9, 0
    %11 = vsyncpa [#allocation4], 0
    %s12 = scalar_lea.sflag [#allocation4], 1
    %13 = vsyncpa %s12, 0
    loop: start=0, step=1, limit=6
    $region2: #{tpu_custom_call.1} parent=1 // loop_pre_header
      _
    $region3: #{tpu_custom_call.1} parent=1 // loop_header
      %s15 = sphi 0, %s19
      %p16 = scmp.ge.s32.totalorder %s15, 6
      %s25 = sphi 0, %s27
      %s28 = sphi 0, %s25
      %s29 = sphi 0, %s28
      %s45 = sphi 0, %s29
      %s75 = sphi 0, %s77
      %s78 = sphi 0, %s75
      %s79 = sphi 0, %s78
      %s95 = sphi 0, %s79
      %s125 = sphi 0, %s127
      %s128 = sphi 0, %s125
      %s129 = sphi 0, %s128
      %s145 = sphi 0, %s129
      %s151 = sphi 0, %s153
      %s154 = sphi 0, %s151
      %s155 = sphi 0, %s154
      %s171 = sphi 0, %s155
    $region4: #{tpu_custom_call.1} parent=1 // loop_header_branch
      %18 = sbr.rel (%p16) target = $region8
    $region5: #{tpu_custom_call.1} parent=1 // loop_body
      %s20 = ssub.s32 %s15, 1
      %s21 = ssub.s32 %s15, 2
      %s22 = sadd.s32 %s15, 1
      %s23 = ssub.s32 %s15, %s22
      %p24 = scmp.eq.s32.totalorder %s23, 0
      %s26 = sadd.s32 %s25, 1
      %s27 = scalar_select %p24, %s25, %s26
      %p30 = pneg %p24
      %p31 = scmp.eq.s32.totalorder %s15, 3
      %p32 = por %p30, %p31
      %p33 = scmp.ne.s32.totalorder %s25, %s28
      %p34 = scmp.eq.s32.totalorder %s15, 0
      %p35 = por %p33, %p34
      %p36 = scmp.ne.s32.totalorder %s25, %s28
      %p37 = scmp.eq.s32.totalorder %s20, 3
      %p38 = por %p36, %p37
      %p39 = scmp.ne.s32.totalorder %s28, %s29
      %p40 = scmp.eq.s32.totalorder %s20, 0
      %p41 = por %p39, %p40
      %p42 = scmp.ne.s32.totalorder %s28, %s29
      %p43 = scmp.eq.s32.totalorder %s21, 3
      %p44 = por %p42, %p43
      %p46 = scmp.ne.s32.totalorder %s29, %s45
      %p47 = scmp.eq.s32.totalorder %s21, 0
      %p48 = por %p46, %p47
      %p49 = scmp.lt.s32.totalorder %s15, 0
      %s50 = ssub.s32 0, %s15
      %s51 = scalar_select %p49, %s50, %s15
      %s52 = sand.u32 %s51, 1
      %s53 = ssub.s32 0, %s52
      %s54 = scalar_select %p49, %s53, %s52
      %p55 = scmp.ne.s32.totalorder %s54, 0
      %p56 = scmp.lt.s32.totalorder %s54, 0
      %p57 = pnand %p56, %p55
      %p58 = pneg %p57
      %s59 = sadd.s32 %s54, 2
      %s60 = scalar_select %p58, %s59, %s54
      %p61 = scmp.lt.s32.totalorder %s22, 0
      %s62 = ssub.s32 0, %s22
      %s63 = scalar_select %p61, %s62, %s22
      %s64 = sand.u32 %s63, 1
      %s65 = ssub.s32 0, %s64
      %s66 = scalar_select %p61, %s65, %s64
      %p67 = scmp.ne.s32.totalorder %s66, 0
      %p68 = scmp.lt.s32.totalorder %s66, 0
      %p69 = pnand %p68, %p67
      %p70 = pneg %p69
      %s71 = sadd.s32 %s66, 2
      %s72 = scalar_select %p70, %s71, %s66
      %s73 = ssub.s32 %s60, %s72
      %p74 = scmp.eq.s32.totalorder %s73, 0
      %s76 = sadd.s32 %s75, 1
      %s77 = scalar_select %p74, %s75, %s76
      %p80 = pneg %p74
      %p81 = scmp.eq.s32.totalorder %s15, 3
      %p82 = por %p80, %p81
      %p83 = scmp.ne.s32.totalorder %s75, %s78
      %p84 = scmp.eq.s32.totalorder %s15, 0
      %p85 = por %p83, %p84
      %p86 = scmp.ne.s32.totalorder %s75, %s78
      %p87 = scmp.eq.s32.totalorder %s20, 3
      %p88 = por %p86, %p87
      %p89 = scmp.ne.s32.totalorder %s78, %s79
      %p90 = scmp.eq.s32.totalorder %s20, 0
      %p91 = por %p89, %p90
      %p92 = scmp.ne.s32.totalorder %s78, %s79
      %p93 = scmp.eq.s32.totalorder %s21, 3
      %p94 = por %p92, %p93
      %p96 = scmp.ne.s32.totalorder %s79, %s95
      %p97 = scmp.eq.s32.totalorder %s21, 0
      %p98 = por %p96, %p97
      %p99 = scmp.lt.s32.totalorder %s15, 0
      %s100 = ssub.s32 0, %s15
      %s101 = scalar_select %p99, %s100, %s15
      %s102 = sand.u32 %s101, 1
      %s103 = ssub.s32 0, %s102
      %s104 = scalar_select %p99, %s103, %s102
      %p105 = scmp.ne.s32.totalorder %s104, 0
      %p106 = scmp.lt.s32.totalorder %s104, 0
      %p107 = pnand %p106, %p105
      %p108 = pneg %p107
      %s109 = sadd.s32 %s104, 2
      %s110 = scalar_select %p108, %s109, %s104
      %p111 = scmp.lt.s32.totalorder %s22, 0
      %s112 = ssub.s32 0, %s22
      %s113 = scalar_select %p111, %s112, %s22
      %s114 = sand.u32 %s113, 1
      %s115 = ssub.s32 0, %s114
      %s116 = scalar_select %p111, %s115, %s114
      %p117 = scmp.ne.s32.totalorder %s116, 0
      %p118 = scmp.lt.s32.totalorder %s116, 0
      %p119 = pnand %p118, %p117
      %p120 = pneg %p119
      %s121 = sadd.s32 %s116, 2
      %s122 = scalar_select %p120, %s121, %s116
      %s123 = ssub.s32 %s110, %s122
      %p124 = scmp.eq.s32.totalorder %s123, 0
      %s126 = sadd.s32 %s125, 1
      %s127 = scalar_select %p124, %s125, %s126
      %p130 = pneg %p124
      %p131 = scmp.eq.s32.totalorder %s15, 3
      %p132 = por %p130, %p131
      %p133 = scmp.ne.s32.totalorder %s125, %s128
      %p134 = scmp.eq.s32.totalorder %s15, 0
      %p135 = por %p133, %p134
      %p136 = scmp.ne.s32.totalorder %s125, %s128
      %p137 = scmp.eq.s32.totalorder %s20, 3
      %p138 = por %p136, %p137
      %p139 = scmp.ne.s32.totalorder %s128, %s129
      %p140 = scmp.eq.s32.totalorder %s20, 0
      %p141 = por %p139, %p140
      %p142 = scmp.ne.s32.totalorder %s128, %s129
      %p143 = scmp.eq.s32.totalorder %s21, 3
      %p144 = por %p142, %p143
      %p146 = scmp.ne.s32.totalorder %s129, %s145
      %p147 = scmp.eq.s32.totalorder %s21, 0
      %p148 = por %p146, %p147
      %s149 = ssub.s32 %s15, %s22
      %p150 = scmp.eq.s32.totalorder %s149, 0
      %s152 = sadd.s32 %s151, 1
      %s153 = scalar_select %p150, %s151, %s152
      %p156 = pneg %p150
      %p157 = scmp.eq.s32.totalorder %s15, 3
      %p158 = por %p156, %p157
      %p159 = scmp.ne.s32.totalorder %s151, %s154
      %p160 = scmp.eq.s32.totalorder %s15, 0
      %p161 = por %p159, %p160
      %p162 = scmp.ne.s32.totalorder %s151, %s154
      %p163 = scmp.eq.s32.totalorder %s20, 3
      %p164 = por %p162, %p163
      %p165 = scmp.ne.s32.totalorder %s154, %s155
      %p166 = scmp.eq.s32.totalorder %s20, 0
      %p167 = por %p165, %p166
      %p168 = scmp.ne.s32.totalorder %s154, %s155
      %p169 = scmp.eq.s32.totalorder %s21, 3
      %p170 = por %p168, %p169
      %p172 = scmp.ne.s32.totalorder %s155, %s171
      %p173 = scmp.eq.s32.totalorder %s21, 0
      %p174 = por %p172, %p173
      %p175 = scmp.le.s32.totalorder 1, %s15
      %p176 = scmp.lt.s32.totalorder %s15, 5
      %p177 = pnand %p175, %p176
      %p178 = pneg %p177
      // Predicated region
      $region9: #{tpu_custom_call.1} parent=5 // pred_check
        _
      $region10: #{tpu_custom_call.1} parent=5 // pred_check_branch
        %180 = sbr.rel (%p177) target = $region12
      $region11: #{tpu_custom_call.1} parent=5 // pred_region
        %s181 = ssub.s32 %s15, 1
      $region12: #{tpu_custom_call.1} parent=5 // pred_fallthru
        _
      %p182 = scmp.lt.s32.totalorder %s15, 4
      // Predicated region
      $region13: #{tpu_custom_call.1} parent=5 // pred_check
        %p183 = pneg %p182
      $region14: #{tpu_custom_call.1} parent=5 // pred_check_branch
        %185 = sbr.rel (%p183) target = $region16
      $region15: #{tpu_custom_call.1} parent=5 // pred_region
        // Predicated region
        $region17: #{tpu_custom_call.1} parent=15 // pred_check
          %p186 = pneg %p35
        $region18: #{tpu_custom_call.1} parent=15 // pred_check_branch
          %188 = sbr.rel (%p186) target = $region20
        $region19: #{tpu_custom_call.1} parent=15 // pred_region
          %s189 = sand.u32 %s25, 1
          %s190 = scalar_lea.sflag [#allocation3], %s189
          %s191 = sand.u32 %s25, 1
          %s192 = smul.addr %s191, 4
          %s193 = scalar_lea.vmem [#allocation2], %s192
          %s195 = ssub.s32 64, 64
          %196 = vsyncadd %s190, %s195
          %s197 = smul.addr %s15, 2
          %s198 = smul.addr %s197, 32
          %s199 = scalar_lea.hbm %s0, %s198
          %s201 = sshll.u32 %s193, 4
          %s202 = int_to_ptr.vmem [resolvable:$true] %s201
          %204 = dma.hbm_to_vmem [thread:$0]  %s199, 64, %s202, %s190
        $region20: #{tpu_custom_call.1} parent=15 // pred_fallthru
          _
        // Predicated region
        $region21: #{tpu_custom_call.1} parent=15 // pred_check
          %p205 = pneg %p85
        $region22: #{tpu_custom_call.1} parent=15 // pred_check_branch
          %207 = sbr.rel (%p205) target = $region24
        $region23: #{tpu_custom_call.1} parent=15 // pred_region
          %p208 = scmp.lt.s32.totalorder %s15, 0
          %s209 = ssub.s32 0, %s15
          %s210 = scalar_select %p208, %s209, %s15
          %s211 = sand.u32 %s210, 1
          %s212 = ssub.s32 0, %s211
          %s213 = scalar_select %p208, %s212, %s211
          %p214 = scmp.ne.s32.totalorder %s213, 0
          %p215 = scmp.lt.s32.totalorder %s213, 0
          %p216 = pnand %p215, %p214
          %p217 = pneg %p216
          %s218 = sadd.s32 %s213, 2
          %s219 = scalar_select %p217, %s218, %s213
          %p220 = scmp.lt.s32.totalorder %s219, 1
          %s221 = scalar_select %p220, %s219, 1
          %s222 = smul.addr %s221, 2
          %s223 = scalar_lea.vmem %s1, %s222
          %p224 = scmp.lt.s32.totalorder %s15, 0
          %s225 = ssub.s32 0, %s15
          %s226 = scalar_select %p224, %s225, %s15
          %s227 = sand.u32 %s226, 1
          %s228 = ssub.s32 0, %s227
          %s229 = scalar_select %p224, %s228, %s227
          %p230 = scmp.ne.s32.totalorder %s229, 0
          %p231 = scmp.lt.s32.totalorder %s229, 0
          %p232 = pnand %p231, %p230
          %p233 = pneg %p232
          %s234 = sadd.s32 %s229, 2
          %s235 = scalar_select %p233, %s234, %s229
        $region24: #{tpu_custom_call.1} parent=15 // pred_fallthru
          _
        // Predicated region
        $region25: #{tpu_custom_call.1} parent=15 // pred_check
          %p236 = pneg %p135
        $region26: #{tpu_custom_call.1} parent=15 // pred_check_branch
          %238 = sbr.rel (%p236) target = $region28
        $region27: #{tpu_custom_call.1} parent=15 // pred_region
          %p239 = scmp.lt.s32.totalorder %s15, 0
          %s240 = ssub.s32 0, %s15
          %s241 = scalar_select %p239, %s240, %s15
          %s242 = sand.u32 %s241, 1
          %s243 = ssub.s32 0, %s242
          %s244 = scalar_select %p239, %s243, %s242
          %p245 = scmp.ne.s32.totalorder %s244, 0
          %p246 = scmp.lt.s32.totalorder %s244, 0
          %p247 = pnand %p246, %p245
          %p248 = pneg %p247
          %s249 = sadd.s32 %s244, 2
          %s250 = scalar_select %p248, %s249, %s244
          %p251 = scmp.lt.s32.totalorder %s250, 1
          %s252 = scalar_select %p251, %s250, 1
          %s253 = smul.addr %s252, 2
          %s254 = scalar_lea.vmem %s2, %s253
          %p255 = scmp.lt.s32.totalorder %s15, 0
          %s256 = ssub.s32 0, %s15
          %s257 = scalar_select %p255, %s256, %s15
          %s258 = sand.u32 %s257, 1
          %s259 = ssub.s32 0, %s258
          %s260 = scalar_select %p255, %s259, %s258
          %p261 = scmp.ne.s32.totalorder %s260, 0
          %p262 = scmp.lt.s32.totalorder %s260, 0
          %p263 = pnand %p262, %p261
          %p264 = pneg %p263
          %s265 = sadd.s32 %s260, 2
          %s266 = scalar_select %p264, %s265, %s260
        $region28: #{tpu_custom_call.1} parent=15 // pred_fallthru
          _
      $region16: #{tpu_custom_call.1} parent=5 // pred_fallthru
        _
      %p267 = scmp.le.s32.totalorder 1, %s15
      %p268 = scmp.lt.s32.totalorder %s15, 5
      %p269 = pnand %p267, %p268
      %p270 = pneg %p269
      // Predicated region
      $region29: #{tpu_custom_call.1} parent=5 // pred_check
        _
      $region30: #{tpu_custom_call.1} parent=5 // pred_check_branch
        %272 = sbr.rel (%p269) target = $region32
      $region31: #{tpu_custom_call.1} parent=5 // pred_region
        %s273 = ssub.s32 %s15, 1
        %s274 = sand.u32 %s28, 1
        %s275 = scalar_lea.sflag [#allocation3], %s274
        %s276 = sand.u32 %s28, 1
        %s277 = smul.addr %s276, 4
        %s278 = scalar_lea.vmem [#allocation2], %s277
        // Predicated region
        $region33: #{tpu_custom_call.1} parent=31 // pred_check
          %p279 = pneg %p41
        $region34: #{tpu_custom_call.1} parent=31 // pred_check_branch
          %281 = sbr.rel (%p279) target = $region36
        $region35: #{tpu_custom_call.1} parent=31 // pred_region
          %282 = dma.done %s275, 64
        $region36: #{tpu_custom_call.1} parent=31 // pred_fallthru
          _
        %s283 = sand.u32 %s28, 1
        %s284 = scalar_lea.sflag [#allocation3], %s283
        %s285 = sand.u32 %s28, 1
        %s286 = smul.addr %s285, 4
        %s287 = scalar_lea.vmem [#allocation2], %s286
        %p288 = pneg %p41
        %p289 = pneg %p38
        %p290 = scmp.lt.s32.totalorder %s20, 0
        %s291 = ssub.s32 0, %s20
        %s292 = scalar_select %p290, %s291, %s20
        %s293 = sand.u32 %s292, 1
        %s294 = ssub.s32 0, %s293
        %s295 = scalar_select %p290, %s294, %s293
        %p296 = scmp.ne.s32.totalorder %s295, 0
        %p297 = scmp.lt.s32.totalorder %s295, 0
        %p298 = pnand %p297, %p296
        %p299 = pneg %p298
        %s300 = sadd.s32 %s295, 2
        %s301 = scalar_select %p299, %s300, %s295
        %p302 = scmp.lt.s32.totalorder %s301, 1
        %s303 = scalar_select %p302, %s301, 1
        %s304 = smul.addr %s303, 2
        %s305 = scalar_lea.vmem %s1, %s304
        %p306 = pneg %p91
        %p307 = pneg %p88
        %p308 = scmp.lt.s32.totalorder %s20, 0
        %s309 = ssub.s32 0, %s20
        %s310 = scalar_select %p308, %s309, %s20
        %s311 = sand.u32 %s310, 1
        %s312 = ssub.s32 0, %s311
        %s313 = scalar_select %p308, %s312, %s311
        %p314 = scmp.ne.s32.totalorder %s313, 0
        %p315 = scmp.lt.s32.totalorder %s313, 0
        %p316 = pnand %p315, %p314
        %p317 = pneg %p316
        %s318 = sadd.s32 %s313, 2
        %s319 = scalar_select %p317, %s318, %s313
        %p320 = scmp.lt.s32.totalorder %s319, 1
        %s321 = scalar_select %p320, %s319, 1
        %s322 = smul.addr %s321, 2
        %s323 = scalar_lea.vmem %s2, %s322
        %p324 = pneg %p141
        %p325 = pneg %p138
        %p326 = pneg %p167
        %p327 = pneg %p164
        %s328 = sand.u32 %s154, 1
        %s329 = scalar_lea.sflag [#allocation4], %s328
        %s330 = sand.u32 %s154, 1
        %s331 = smul.addr %s330, 4
        %s332 = scalar_lea.vmem [#allocation5], %s331
        %p333 = scmp.lt.s32.totalorder %s20, 0
        %s334 = ssub.s32 0, %s20
        %s335 = scalar_select %p333, %s334, %s20
        %s336 = sand.u32 %s335, 1
        %s337 = ssub.s32 0, %s336
        %s338 = scalar_select %p333, %s337, %s336
        %p339 = scmp.ne.s32.totalorder %s338, 0
        %p340 = scmp.lt.s32.totalorder %s338, 0
        %p341 = pnand %p340, %p339
        %p342 = pneg %p341
        %s343 = sadd.s32 %s338, 2
        %s344 = scalar_select %p342, %s343, %s338
        %p345 = scmp.lt.s32.totalorder %s344, 1
        %s346 = scalar_select %p345, %s344, 1
        %s347 = smul.addr %s346, 2
        %s348 = scalar_lea.vmem %s1, %s347
        %p349 = scmp.lt.s32.totalorder %s20, 0
        %s350 = ssub.s32 0, %s20
        %s351 = scalar_select %p349, %s350, %s20
        %s352 = sand.u32 %s351, 1
        %s353 = ssub.s32 0, %s352
        %s354 = scalar_select %p349, %s353, %s352
        %p355 = scmp.ne.s32.totalorder %s354, 0
        %p356 = scmp.lt.s32.totalorder %s354, 0
        %p357 = pnand %p356, %p355
        %p358 = pneg %p357
        %s359 = sadd.s32 %s354, 2
        %s360 = scalar_select %p358, %s359, %s354
        %p361 = scmp.lt.s32.totalorder %s20, 0
        %s362 = ssub.s32 0, %s20
        %s363 = scalar_select %p361, %s362, %s20
        %s364 = sand.u32 %s363, 1
        %s365 = ssub.s32 0, %s364
        %s366 = scalar_select %p361, %s365, %s364
        %p367 = scmp.ne.s32.totalorder %s366, 0
        %p368 = scmp.lt.s32.totalorder %s366, 0
        %p369 = pnand %p368, %p367
        %p370 = pneg %p369
        %s371 = sadd.s32 %s366, 2
        %s372 = scalar_select %p370, %s371, %s366
        %p373 = scmp.lt.s32.totalorder %s372, 1
        %s374 = scalar_select %p373, %s372, 1
        %s375 = smul.addr %s374, 2
        %s376 = scalar_lea.vmem %s2, %s375
        %p377 = scmp.lt.s32.totalorder %s20, 0
        %s378 = ssub.s32 0, %s20
        %s379 = scalar_select %p377, %s378, %s20
        %s380 = sand.u32 %s379, 1
        %s381 = ssub.s32 0, %s380
        %s382 = scalar_select %p377, %s381, %s380
        %p383 = scmp.ne.s32.totalorder %s382, 0
        %p384 = scmp.lt.s32.totalorder %s382, 0
        %p385 = pnand %p384, %p383
        %p386 = pneg %p385
        %s387 = sadd.s32 %s382, 2
        %s388 = scalar_select %p386, %s387, %s382
        %v389 = vld [vmem:[%s278] sm:$0xf]
        %v392 = vunpack.c.l.s4 1983009808
        %v393 = vunpack.c.0.s8 %v392
        %v394 = vlaneseq
        %v395 = vshrl.u32 %v394, 7
        %v396 = vsub.s32 %v393, %v395
        %v397 = vrot.slane %v389, %v396
        %v398 = vcombine.high %v397, %v397
        %vm401 = vcmask 1041408
        %v402 = vsel %vm401, %v397, 0.0
        %v403 = vsel %vm401, %v398, 0.0
        %v404 = vadd.f32 %v402, %v403
        %405 = vadd.xlane.f32.xlu0 %v404
        %v406 = vpop.xlane.xlu0 %405
        %v407 = vrot.slane %v406, 4
        %v408 = vadd.f32 %v406, %v407
        %v409 = vrot.slane %v408, 2
        %v410 = vadd.f32 %v408, %v409
        %v411 = vrot.slane %v410, 1
        %v412 = vadd.f32 %v410, %v411
        %s413 = vtos %v412
        %v414 = vmul.f32 %v389, %v389
        %v417 = vunpack.c.l.s4 1983009808
        %v418 = vunpack.c.0.s8 %v417
        %v419 = vlaneseq
        %v420 = vshrl.u32 %v419, 7
        %v421 = vsub.s32 %v418, %v420
        %v422 = vrot.slane %v414, %v421
        %v423 = vcombine.high %v422, %v422
        %v426 = vsel %vm401, %v422, 0.0
        %v427 = vsel %vm401, %v423, 0.0
        %v428 = vadd.f32 %v426, %v427
        %429 = vadd.xlane.f32.xlu0 %v428
        %v430 = vpop.xlane.xlu0 %429
        %v431 = vrot.slane %v430, 4
        %v432 = vadd.f32 %v430, %v431
        %v433 = vrot.slane %v432, 2
        %v434 = vadd.f32 %v432, %v433
        %v435 = vrot.slane %v434, 1
        %v436 = vadd.f32 %v434, %v435
        %s437 = vtos %v436
        %v438 = vrcp.pop 512.0
        %s439 = vtos %v438
        %s440 = smul.f32 %s413, %s439
        %s441 = smul.f32 %s413, %s440
        %s442 = ssub.f32 %s437, %s441
        %v443 = vrcp.pop 511.0
        %s444 = vtos %v443
        %s445 = smul.f32 %s442, %s444
        %s446 = smax.f32 %s445, 0.0
        %s447 = sadd.f32 %s446, 1e-06
        %v448 = vstv %s447
        %v449 = vrsqrt.pop %v448
        %s450 = vtos %v449
        %v451 = vld [vmem:[%s348] sm:$0x3]
        %v452 = vld [vmem:[%s376] sm:$0x3]
        %v453 = vstv %s450
        %v454 = vmul.f32 %v451, %v453
        %v455 = vstv %s440
        %v456 = vmul.f32 %v455, %v454
        %v457 = vsub.f32 %v452, %v456
        %459 = vset.pattern.permute.xlu0 0
        %460 = vperm.xlu0 %459, %v454
        %v461 = vpop.permute.xlu0 %460
        %v463 = vunpack.c.l.s4 269488144
        %v464 = vunpack.c.0.s8 %v463
        %v465 = vlaneseq
        %v466 = vshrl.u32 %v465, 7
        %v467 = vsub.s32 %v464, %v466
        %v468 = vrot.slane %v461, %v467
        %v470 = vmul.f32 %v389, %v468
        %472 = vset.pattern.permute.xlu0 0
        %473 = vperm.xlu0 %472, %v457
        %v474 = vpop.permute.xlu0 %473
        %v476 = vunpack.c.l.s4 269488144
        %v477 = vunpack.c.0.s8 %v476
        %v478 = vlaneseq
        %v479 = vshrl.u32 %v478, 7
        %v480 = vsub.s32 %v477, %v479
        %v481 = vrot.slane %v474, %v480
        %v483 = vadd.f32 %v470, %v481
        %484 = vst [vmem:[%s332] sm:$0xf] %v483
        %s485 = sand.u32 %s154, 1
        %s486 = scalar_lea.sflag [#allocation4], %s485
        %s487 = sand.u32 %s154, 1
        %s488 = smul.addr %s487, 4
        %s489 = scalar_lea.vmem [#allocation5], %s488
        // Predicated region
        $region37: #{tpu_custom_call.1} parent=31 // pred_check
          %p490 = pneg %p164
        $region38: #{tpu_custom_call.1} parent=31 // pred_check_branch
          %492 = sbr.rel (%p490) target = $region40
        $region39: #{tpu_custom_call.1} parent=31 // pred_region
          %s494 = ssub.s32 64, 64
          %495 = vsyncadd %s486, %s494
          %s496 = smul.addr %s20, 2
          %s497 = smul.addr %s496, 32
          %s498 = scalar_lea.hbm %s3, %s497
          %s500 = sshll.u32 %s489, 4
          %s501 = int_to_ptr.vmem [resolvable:$true] %s500
          %503 = dma.vmem_to_hbm [thread:$0]  %s501, 64, %s498, %s486
        $region40: #{tpu_custom_call.1} parent=31 // pred_fallthru
          _
      $region32: #{tpu_custom_call.1} parent=5 // pred_fallthru
        _
      %p504 = scmp.le.s32.totalorder 2, %s15
      // Predicated region
      $region41: #{tpu_custom_call.1} parent=5 // pred_check
        %p505 = pneg %p504
      $region42: #{tpu_custom_call.1} parent=5 // pred_check_branch
        %507 = sbr.rel (%p505) target = $region44
      $region43: #{tpu_custom_call.1} parent=5 // pred_region
        %s508 = ssub.s32 %s15, 2
        // Predicated region
        $region45: #{tpu_custom_call.1} parent=43 // pred_check
          %p509 = pneg %p170
        $region46: #{tpu_custom_call.1} parent=43 // pred_check_branch
          %511 = sbr.rel (%p509) target = $region48
        $region47: #{tpu_custom_call.1} parent=43 // pred_region
          %s512 = sand.u32 %s155, 1
          %s513 = scalar_lea.sflag [#allocation4], %s512
          %s514 = sand.u32 %s155, 1
          %s515 = smul.addr %s514, 4
          %s516 = scalar_lea.vmem [#allocation5], %s515
          %517 = dma.done %s513, 64
        $region48: #{tpu_custom_call.1} parent=43 // pred_fallthru
          _
      $region44: #{tpu_custom_call.1} parent=5 // pred_fallthru
        _
    $region6: #{tpu_custom_call.1} parent=1 // loop_footer
      %s19 = sadd.s32 1, %s15
    $region7: #{tpu_custom_call.1} parent=1 // loop_footer_branch
      %14 = sbr.rel target = $region3
    $region8: #{tpu_custom_call.1} parent=1 // loop_exit
      _
    %518 = vsyncpa [#allocation3], 1
    %s519 = scalar_lea.sflag [#allocation3], 1
    %520 = vsyncpa %s519, 1
    %521 = vsyncpa [#allocation4], 1
    %s522 = scalar_lea.sflag [#allocation4], 1
    %523 = vsyncpa %s522, 1

</llo_original>
